<compile_context>
chip_gen: v5e
topology: v5e:2x2
jax: 0.10.0
libtpu: 0.0.40
codegen_flags: <defaults>
</compile_context>

<pallas_src>
import jax
import jax.numpy as jnp
from jax.experimental import pallas as pl
from jax.experimental.pallas import tpu as pltpu

LANE = 128


def _cdiv(a, b):
    return -(-a // b)


def _round_up(x, m):
    return _cdiv(x, m) * m


def _next_pow2(x):
    p = 1
    while p < x:
        p *= 2
    return p


def _make_global_features_kernel(n_nodes, n_edges, n_tiles_node, n_tiles_total):
    inv_n = 1.0 / float(max(n_nodes, 1))   # guard against degenerate empty graphs
    inv_e = 1.0 / float(max(n_edges, 1))

    def kernel(stream_ref, fold_ref, g_ref, w1_ref, b1_ref, w2_ref, b2_ref,
               out_ref, acc_node_ref, acc_edge_ref):
        t = pl.program_id(0)

        @pl.when(t == 0)
        def _init():
            acc_node_ref[...] = jnp.zeros(acc_node_ref.shape, jnp.float32)
            acc_edge_ref[...] = jnp.zeros(acc_edge_ref.shape, jnp.float32)

        # Pure elementwise vadds: (T, W) -> (T/8, 8, W) -> sum over leading axis.
        # Zero padding rows/lanes added by the wrapper are sum-neutral.
        tile = stream_ref[...]
        if tile.dtype != jnp.float32:
            tile = tile.astype(jnp.float32)
        part = jnp.sum(tile.reshape(-1, 8, tile.shape[-1]), axis=0)   # (8, W)

        @pl.when(t < n_tiles_node)
        def _acc_node():
            acc_node_ref[...] += part

        @pl.when(t >= n_tiles_node)
        def _acc_edge():
            acc_edge_ref[...] += part

        @pl.when(t == n_tiles_total - 1)
        def _finalize():
            fold = fold_ref[...]                                    # (W, C_in) 0/1
            vn = jnp.sum(acc_node_ref[...], axis=0, keepdims=True)  # (1, W)
            ve = jnp.sum(acc_edge_ref[...], axis=0, keepdims=True)  # (1, W)
            # Lane/group fold back to channels (runs once): interleaved 128/C_pad
            # groups collapse via a tiny matmul with a 0/1 selection matrix.
            mean_node = jnp.dot(vn, fold, preferred_element_type=jnp.float32) * inv_n
            mean_edge = jnp.dot(ve, fold, preferred_element_type=jnp.float32) * inv_e
            g = g_ref[...].astype(jnp.float32)                      # (1, C_in)

            # Three 2-layer MLPs; layer 1 uses the stacked weights (no zero
            # block-diag), layer 2 uses the row-stacked W2 (stacking on the
            # contraction axis sums the three MLP outputs).
            b1 = b1_ref[...]                                        # (3, C_hid)
            h1 = jnp.maximum(jnp.dot(mean_node, w1_ref[0],
                                     preferred_element_type=jnp.float32) + b1[0:1, :], 0.0)
            h2 = jnp.maximum(jnp.dot(mean_edge, w1_ref[1],
                                     preferred_element_type=jnp.float32) + b1[1:2, :], 0.0)
            h3 = jnp.maximum(jnp.dot(g, w1_ref[2],
                                     preferred_element_type=jnp.float32) + b1[2:3, :], 0.0)
            h = jnp.concatenate([h1, h2, h3], axis=-1)              # (1, 3*C_hid)
            inter = jnp.dot(h, w2_ref[...],
                            preferred_element_type=jnp.float32) + b2_ref[...]

            # InstanceNorm1d over the (1, C_out) vector: population variance,
            # eps = 1e-5, no affine params.
            mu = jnp.mean(inter, axis=-1, keepdims=True)
            var = jnp.mean((inter - mu) ** 2, axis=-1, keepdims=True)
            normed = (inter - mu) * jax.lax.rsqrt(var + 1e-5)

            # TODO(synk): nn.Dropout(p=0.1) is constructed fresh in forward()
            # (training mode, stochastic); implemented here as identity
            # (inference semantics).
            out_ref[...] = (g + jnp.maximum(normed, 0.0)).astype(out_ref.dtype)

    return kernel


def pack_global_features_params(params):
    """Pack 3 independent (fc1, fc2) MLPs once, outside the per-call path.

    params = (fcnn_one, fcnn_two, fcnn_three), each (w1, b1, w2, b2) with
    weights stored pre-transposed as [in, out] and biases as (1, out)."""
    (w1a, b1a, w2a, b2a), (w1b, b1b, w2b, b2b), (w1c, b1c, w2c, b2c) = params
    f32 = jnp.float32
    w1s = jnp.stack([w1a, w1b, w1c], axis=0).astype(f32)          # (3, C_in, C_hid)
    b1s = jnp.concatenate([b1a, b1b, b1c], axis=0).astype(f32)    # (3, C_hid)
    w2p = jnp.concatenate([w2a, w2b, w2c], axis=0).astype(f32)    # (3*C_hid, C_out)
    b2p = (b2a + b2b + b2c).astype(f32)                           # (1, C_out)
    return w1s, b1s, w2p, b2p


def _lane_pack(x2d, c_pad, w_lanes):
    """(R, C_in) -> lane-dense (rows, w_lanes) with zero (sum-neutral) padding."""
    r, c_in = x2d.shape
    if c_pad > c_in:
        x2d = jnp.pad(x2d, ((0, 0), (0, c_pad - c_in)))
    if w_lanes == c_pad:
        return x2d
    flat = x2d.reshape(-1)
    total = _round_up(max(flat.shape[0], 1), w_lanes)
    if total > flat.shape[0]:
        flat = jnp.pad(flat, (0, total - flat.shape[0]))
    return flat.reshape(-1, w_lanes)


def global_features_forward(node_features, edge_index, edge_features,
                            global_features, packed_params,
                            *, tile_bytes=4 * 1024 * 1024):
    """packed_params = pack_global_features_params(params) (pack once, reuse)."""
    del edge_index   # not used by the forward compute (kept for signature parity)

    w1s, b1s, w2p, b2p = packed_params
    _, c_in, c_hid = w1s.shape
    c_out = w2p.shape[1]
    assert c_out == c_in, "residual add requires c_out2 == c_in1"

    # Keep the source dtype (bf16 stays bf16 -> half the HBM bytes); upcast
    # happens inside the kernel accumulation.
    stream_dtype = jnp.promote_types(node_features.dtype, edge_features.dtype)
    node0 = node_features[0].astype(stream_dtype)                 # (N, C_in)
    edge0 = edge_features[0].astype(stream_dtype)                 # (E, C_in)
    g00 = global_features[0, 0][None, :]                          # (1, C_in)
    assert node0.shape[1] == c_in and edge0.shape[1] == c_in

    n_nodes = node0.shape[0]
    n_edges = edge0.shape[0]

    # Lane-dense packing: pad channels to a power of two dividing 128 and pack
    # 128/C_pad rows per 128-lane stream row (C_in <= 128), or pad channels to
    # a multiple of 128 (C_in > 128).
    if c_in <= LANE:
        c_pad = _next_pow2(c_in)          # power of two <= 128 always divides 128
        w_lanes = LANE
    else:
        c_pad = _round_up(c_in, LANE)
        w_lanes = c_pad

    node_rows = _lane_pack(node0, c_pad, w_lanes)
    edge_rows = _lane_pack(edge0, c_pad, w_lanes)

    # 0/1 fold matrix mapping stream lanes back to channels (padded channels drop).
    lane_idx = jnp.arange(w_lanes, dtype=jnp.int32)[:, None]
    chan_idx = jnp.arange(c_in, dtype=jnp.int32)[None, :]
    fold = ((lane_idx % c_pad) == chan_idx).astype(jnp.float32)   # (W, C_in)

    # Large lane-dense tiles (~tile_bytes per pipeline buffer), rows a multiple
    # of 32 (covers f32/bf16/int8 sublane packing), capped for tiny inputs.
    dtype_bytes = jnp.dtype(stream_dtype).itemsize
    max_rows = max(node_rows.shape[0], edge_rows.shape[0], 1)
    target_rows = max(32, (tile_bytes // (w_lanes * dtype_bytes)) // 32 * 32)
    tile_rows = min(target_rows, _round_up(max_rows, 32))

    def _pad_to_tiles(x):
        n_tiles = max(1, _cdiv(x.shape[0], tile_rows))
        rows = n_tiles * tile_rows
        if rows > x.shape[0]:
            x = jnp.pad(x, ((0, rows - x.shape[0]), (0, 0)))
        return x, n_tiles

    node_rows, n_tiles_node = _pad_to_tiles(node_rows)
    edge_rows, n_tiles_edge = _pad_to_tiles(edge_rows)
    # One concatenated stream: node tiles first, then edge tiles.  Each stream
    # is padded only to its OWN tile multiple (no max(N, E) padding).
    stream = jnp.concatenate([node_rows, edge_rows], axis=0)
    n_tiles_total = n_tiles_node + n_tiles_edge

    grid_spec = pltpu.PrefetchScalarGridSpec(
        num_scalar_prefetch=0,
        grid=(n_tiles_total,),
        in_specs=[
            pl.BlockSpec((tile_rows, w_lanes), lambda t: (t, 0)),     # stream tile
            pl.BlockSpec((w_lanes, c_in), lambda t: (0, 0)),          # fold matrix
            pl.BlockSpec((1, c_in), lambda t: (0, 0)),                # global row
            pl.BlockSpec((3, c_in, c_hid), lambda t: (0, 0, 0)),      # W1 stacked
            pl.BlockSpec((3, c_hid), lambda t: (0, 0)),               # b1 stacked
            pl.BlockSpec((3 * c_hid, c_out), lambda t: (0, 0)),       # W2 row-stacked
            pl.BlockSpec((1, c_out), lambda t: (0, 0)),               # b2 summed
        ],
        out_specs=pl.BlockSpec((1, c_out), lambda t: (0, 0)),
        scratch_shapes=[pltpu.VMEM((8, w_lanes), jnp.float32),        # node acc
                        pltpu.VMEM((8, w_lanes), jnp.float32)],       # edge acc
    )

    stream_bytes = int(stream.size) * dtype_bytes
    param_bytes = 4 * int(w1s.size + b1s.size + w2p.size + b2p.size + fold.size)
    cost = pl.CostEstimate(
        flops=int(stream.size)                                        # streaming adds
              + 2 * w_lanes * c_in                                    # fold matmuls
              + 2 * (3 * c_in * c_hid + 3 * c_hid * c_out),           # tiny MLP epilogue
        transcendentals=0,
        bytes_accessed=stream_bytes + param_bytes + 8 * c_in,
    )

    updated_row = pl.pallas_call(
        _make_global_features_kernel(n_nodes, n_edges, n_tiles_node, n_tiles_total),
        out_shape=jax.ShapeDtypeStruct((1, c_out), jnp.float32),
        grid_spec=grid_spec,
        compiler_params=pltpu.CompilerParams(
            dimension_semantics=("arbitrary",),        # accumulated reduction axis
            vmem_limit_bytes=32 * 1024 * 1024,         # fits v5e/v6e/v7x comfortably
        ),
        cost_estimate=cost,
    )(stream, fold, g00, w1s, b1s, w2p, b2p)

    # global_features_updated = global_features.clone(); [0][0] <- updated row.
    if global_features.shape[0] == 1 and global_features.shape[1] == 1:
        return updated_row.reshape(global_features.shape).astype(global_features.dtype)
    return global_features.at[0, 0].set(updated_row[0].astype(global_features.dtype))


def _init_fcnn_params(key, c_in, c_hidden, c_out):
    """Deterministic PyTorch-Linear-style init; weights stored as [in, out]."""
    k1, k2, k3, k4 = jax.random.split(key, 4)
    lim1 = 1.0 / jnp.sqrt(float(c_in))
    lim2 = 1.0 / jnp.sqrt(float(c_hidden))
    w1 = jax.random.uniform(k1, (c_in, c_hidden), jnp.float32, -lim1, lim1)
    b1 = jax.random.uniform(k2, (1, c_hidden), jnp.float32, -lim1, lim1)
    w2 = jax.random.uniform(k3, (c_hidden, c_out), jnp.float32, -lim2, lim2)
    b2 = jax.random.uniform(k4, (1, c_out), jnp.float32, -lim2, lim2)
    return w1, b1, w2, b2


def _reference_forward(node_features, edge_features, global_features, params):
    """Pure-JAX reference mirroring the PyTorch forward (inference semantics)."""
    node0 = node_features[0].astype(jnp.float32)
    edge0 = edge_features[0].astype(jnp.float32)
    g = global_features[0, 0].astype(jnp.float32)

    def mlp(x, p):
        w1, b1, w2, b2 = p
        h = jnp.maximum(x @ w1 + b1[0], 0.0)
        return h @ w2 + b2[0]

    mean_node = jnp.sum(node0, axis=0) / node0.shape[0]
    mean_edge = jnp.sum(edge0, axis=0) / edge0.shape[0]
    inter = mlp(mean_node, params[0]) + mlp(mean_edge, params[1]) + mlp(g, params[2])
    mu = jnp.mean(inter)
    var = jnp.mean((inter - mu) ** 2)
    normed = (inter - mu) / jnp.sqrt(var + 1e-5)
    return global_features.at[0, 0].set(g + jnp.maximum(normed, 0.0))


if __name__ == "__main__":
    # Small shapes consistent with the module's forward (asymmetric N vs E to
    # exercise the no-padding node/edge routing).
    N, E = 12, 40
    C_IN, C_HID, C_OUT = 16, 32, 16   # C_OUT must equal C_IN for the residual add

    key = jax.random.PRNGKey(0)
    k_node, k_edge, k_glob, k_p1, k_p2, k_p3, k_idx = jax.random.split(key, 7)

    node_features = jax.random.normal(k_node, (1, N, C_IN), jnp.float32)
    edge_features = jax.random.normal(k_edge, (1, E, C_IN), jnp.float32)
    global_features = jax.random.normal(k_glob, (1, 1, C_IN), jnp.float32)
    edge_index = jax.random.randint(k_idx, (2, E), 0, N, jnp.int32)

    params = (
        _init_fcnn_params(k_p1, C_IN, C_HID, C_OUT),
        _init_fcnn_params(k_p2, C_IN, C_HID, C_OUT),
        _init_fcnn_params(k_p3, C_IN, C_HID, C_OUT),
    )
    packed = pack_global_features_params(params)   # packed once, reused per call

    out = global_features_forward(node_features, edge_index, edge_features,
                                  global_features, packed)
    jax.block_until_ready(out)

    ref = _reference_forward(node_features, edge_features, global_features, params)
    assert out.shape == global_features.shape and out.dtype == jnp.float32
    err = float(jnp.max(jnp.abs(out - ref)))
    assert jnp.allclose(out, ref, atol=1e-4, rtol=1e-4), err
    print("KERNEL_OK")
</pallas_src>

<mosaic_0001>
module attributes {stable_mosaic.version = 11 : i64} {
  func.func @kernel(%arg0: i32, %arg1: memref<32x128xf32, #tpu.memory_space<vmem>>, %arg2: memref<128x16xf32, #tpu.memory_space<vmem>>, %arg3: memref<1x16xf32, #tpu.memory_space<vmem>>, %arg4: memref<3x16x32xf32, #tpu.memory_space<vmem>>, %arg5: memref<3x32xf32, #tpu.memory_space<vmem>>, %arg6: memref<96x16xf32, #tpu.memory_space<vmem>>, %arg7: memref<1x16xf32, #tpu.memory_space<vmem>>, %arg8: memref<1x16xf32, #tpu.memory_space<vmem>>, %arg9: memref<8x128xf32, #tpu.memory_space<vmem>>, %arg10: memref<8x128xf32, #tpu.memory_space<vmem>>) attributes {dimension_semantics = [#tpu.dimension_semantics<arbitrary>], iteration_bounds = array<i64: 2>, scalar_prefetch = 0 : i64, scratch_operands = 2 : i64, tpu.core_type = #tpu.core_type<tc>, window_params = [{transform_indices = @transform_0, window_bounds = array<i64: 32, 128>}, {pipeline_mode = #tpu.pipeline_mode<synchronous>, transform_indices = @transform_1, window_bounds = array<i64: 128, 16>}, {pipeline_mode = #tpu.pipeline_mode<synchronous>, transform_indices = @transform_2, window_bounds = array<i64: 1, 16>}, {pipeline_mode = #tpu.pipeline_mode<synchronous>, transform_indices = @transform_3, window_bounds = array<i64: 3, 16, 32>}, {pipeline_mode = #tpu.pipeline_mode<synchronous>, transform_indices = @transform_4, window_bounds = array<i64: 3, 32>}, {pipeline_mode = #tpu.pipeline_mode<synchronous>, transform_indices = @transform_5, window_bounds = array<i64: 96, 16>}, {pipeline_mode = #tpu.pipeline_mode<synchronous>, transform_indices = @transform_6, window_bounds = array<i64: 1, 16>}, {pipeline_mode = #tpu.pipeline_mode<synchronous>, transform_indices = @transform_7, window_bounds = array<i64: 1, 16>}]} {
    %c0_i32 = arith.constant 0 : i32
    %0 = arith.cmpi eq, %arg0, %c0_i32 : i32
    %1 = arith.extui %0 : i1 to i32
    %c0_i32_0 = arith.constant 0 : i32
    %2 = arith.cmpi ne, %1, %c0_i32_0 : i32
    scf.if %2 {
      %cst_7 = arith.constant 0.000000e+00 : f32
      %15 = vector.broadcast %cst_7 : f32 to vector<8x128xf32>
      %c0_8 = arith.constant 0 : index
      %c0_9 = arith.constant 0 : index
      %16 = vector.load %arg9[%c0_8, %c0_9] : memref<8x128xf32, #tpu.memory_space<vmem>>, vector<8x128xf32>
      tpu.vector_store %arg9[%c0_8, %c0_9], %15 {strides = array<i32>} : memref<8x128xf32, #tpu.memory_space<vmem>>, vector<8x128xf32>,
      %cst_10 = arith.constant 0.000000e+00 : f32
      %17 = vector.broadcast %cst_10 : f32 to vector<8x128xf32>
      %c0_11 = arith.constant 0 : index
      %c0_12 = arith.constant 0 : index
      %18 = vector.load %arg10[%c0_11, %c0_12] : memref<8x128xf32, #tpu.memory_space<vmem>>, vector<8x128xf32>
      tpu.vector_store %arg10[%c0_11, %c0_12], %17 {strides = array<i32>} : memref<8x128xf32, #tpu.memory_space<vmem>>, vector<8x128xf32>,
    } else {
    }
    %c0 = arith.constant 0 : index
    %c0_1 = arith.constant 0 : index
    %3 = vector.load %arg1[%c0, %c0_1] : memref<32x128xf32, #tpu.memory_space<vmem>>, vector<32x128xf32>
    %4 = vector.shape_cast %3 : vector<32x128xf32> to vector<4x8x128xf32>
    %cst = arith.constant dense<0.000000e+00> : vector<8x128xf32>
    %5 = vector.multi_reduction <add>, %4, %cst [0] : vector<4x8x128xf32> to vector<8x128xf32>
    %c1_i32 = arith.constant 1 : i32
    %6 = arith.cmpi slt, %arg0, %c1_i32 : i32
    %7 = arith.extui %6 : i1 to i32
    %c0_i32_2 = arith.constant 0 : i32
    %8 = arith.cmpi ne, %7, %c0_i32_2 : i32
    scf.if %8 {
      %c0_7 = arith.constant 0 : index
      %c0_8 = arith.constant 0 : index
      %15 = vector.load %arg9[%c0_7, %c0_8] : memref<8x128xf32, #tpu.memory_space<vmem>>, vector<8x128xf32>
      %16 = arith.addf %15, %5 : vector<8x128xf32>
      %c0_9 = arith.constant 0 : index
      %c0_10 = arith.constant 0 : index
      %17 = vector.load %arg9[%c0_9, %c0_10] : memref<8x128xf32, #tpu.memory_space<vmem>>, vector<8x128xf32>
      tpu.vector_store %arg9[%c0_9, %c0_10], %16 {strides = array<i32>} : memref<8x128xf32, #tpu.memory_space<vmem>>, vector<8x128xf32>,
    } else {
    }
    %c1_i32_3 = arith.constant 1 : i32
    %9 = arith.cmpi sge, %arg0, %c1_i32_3 : i32
    %10 = arith.extui %9 : i1 to i32
    %c0_i32_4 = arith.constant 0 : i32
    %11 = arith.cmpi ne, %10, %c0_i32_4 : i32
    scf.if %11 {
      %c0_7 = arith.constant 0 : index
      %c0_8 = arith.constant 0 : index
      %15 = vector.load %arg10[%c0_7, %c0_8] : memref<8x128xf32, #tpu.memory_space<vmem>>, vector<8x128xf32>
      %16 = arith.addf %15, %5 : vector<8x128xf32>
      %c0_9 = arith.constant 0 : index
      %c0_10 = arith.constant 0 : index
      %17 = vector.load %arg10[%c0_9, %c0_10] : memref<8x128xf32, #tpu.memory_space<vmem>>, vector<8x128xf32>
      tpu.vector_store %arg10[%c0_9, %c0_10], %16 {strides = array<i32>} : memref<8x128xf32, #tpu.memory_space<vmem>>, vector<8x128xf32>,
    } else {
    }
    %c1_i32_5 = arith.constant 1 : i32
    %12 = arith.cmpi eq, %arg0, %c1_i32_5 : i32
    %13 = arith.extui %12 : i1 to i32
    %c0_i32_6 = arith.constant 0 : i32
    %14 = arith.cmpi ne, %13, %c0_i32_6 : i32
    scf.if %14 {
      %c0_7 = arith.constant 0 : index
      %c0_8 = arith.constant 0 : index
      %15 = vector.load %arg2[%c0_7, %c0_8] : memref<128x16xf32, #tpu.memory_space<vmem>>, vector<128x16xf32>
      %c0_9 = arith.constant 0 : index
      %c0_10 = arith.constant 0 : index
      %16 = vector.load %arg9[%c0_9, %c0_10] : memref<8x128xf32, #tpu.memory_space<vmem>>, vector<8x128xf32>
      %cst_11 = arith.constant dense<0.000000e+00> : vector<128xf32>
      %17 = vector.multi_reduction <add>, %16, %cst_11 [0] : vector<8x128xf32> to vector<128xf32>
      %18 = vector.shape_cast %17 : vector<128xf32> to vector<1x128xf32>
      %c0_12 = arith.constant 0 : index
      %c0_13 = arith.constant 0 : index
      %19 = vector.load %arg10[%c0_12, %c0_13] : memref<8x128xf32, #tpu.memory_space<vmem>>, vector<8x128xf32>
      %cst_14 = arith.constant dense<0.000000e+00> : vector<128xf32>
      %20 = vector.multi_reduction <add>, %19, %cst_14 [0] : vector<8x128xf32> to vector<128xf32>
      %21 = vector.shape_cast %20 : vector<128xf32> to vector<1x128xf32>
      %cst_15 = arith.constant dense<0.000000e+00> : vector<1x16xf32>
      %22 = tpu.matmul %18, %15, %cst_15 {dimension_numbers = #tpu.dot_dimension_numbers<[1], [0], [0], [1], [0, 0, 1, 1], [], []>} : vector<1x128xf32>, vector<128x16xf32>, vector<1x16xf32> -> vector<1x16xf32>
      %cst_16 = arith.constant 0.0833333358 : f32
      %23 = vector.broadcast %cst_16 : f32 to vector<1x16xf32>
      %24 = arith.mulf %22, %23 : vector<1x16xf32>
      %cst_17 = arith.constant dense<0.000000e+00> : vector<1x16xf32>
      %25 = tpu.matmul %21, %15, %cst_17 {dimension_numbers = #tpu.dot_dimension_numbers<[1], [0], [0], [1], [0, 0, 1, 1], [], []>} : vector<1x128xf32>, vector<128x16xf32>, vector<1x16xf32> -> vector<1x16xf32>
      %cst_18 = arith.constant 2.500000e-02 : f32
      %26 = vector.broadcast %cst_18 : f32 to vector<1x16xf32>
      %27 = arith.mulf %25, %26 : vector<1x16xf32>
      %c0_19 = arith.constant 0 : index
      %c0_20 = arith.constant 0 : index
      %28 = vector.load %arg3[%c0_19, %c0_20] : memref<1x16xf32, #tpu.memory_space<vmem>>, vector<1x16xf32>
      %c0_21 = arith.constant 0 : index
      %c0_22 = arith.constant 0 : index
      %29 = vector.load %arg5[%c0_21, %c0_22] : memref<3x32xf32, #tpu.memory_space<vmem>>, vector<3x32xf32>
      %c0_23 = arith.constant 0 : index
      %c0_24 = arith.constant 0 : index
      %c0_25 = arith.constant 0 : index
      %30 = vector.load %arg4[%c0_23, %c0_24, %c0_25] : memref<3x16x32xf32, #tpu.memory_space<vmem>>, vector<1x16x32xf32>
      %31 = vector.shape_cast %30 : vector<1x16x32xf32> to vector<16x32xf32>
      %cst_26 = arith.constant dense<0.000000e+00> : vector<1x32xf32>
      %32 = tpu.matmul %24, %31, %cst_26 {dimension_numbers = #tpu.dot_dimension_numbers<[1], [0], [0], [1], [0, 0, 1, 1], [], []>} : vector<1x16xf32>, vector<16x32xf32>, vector<1x32xf32> -> vector<1x32xf32>
      %33 = vector.extract_strided_slice %29 {offsets = [0, 0], sizes = [1, 32], strides = [1, 1]} : vector<3x32xf32> to vector<1x32xf32>
      %34 = arith.addf %32, %33 : vector<1x32xf32>
      %cst_27 = arith.constant 0.000000e+00 : f32
      %35 = vector.broadcast %cst_27 : f32 to vector<1x32xf32>
      %36 = arith.maximumf %34, %35 : vector<1x32xf32>
      %c1 = arith.constant 1 : index
      %c0_28 = arith.constant 0 : index
      %c0_29 = arith.constant 0 : index
      %37 = vector.load %arg4[%c1, %c0_28, %c0_29] : memref<3x16x32xf32, #tpu.memory_space<vmem>>, vector<1x16x32xf32>
      %38 = vector.shape_cast %37 : vector<1x16x32xf32> to vector<16x32xf32>
      %cst_30 = arith.constant dense<0.000000e+00> : vector<1x32xf32>
      %39 = tpu.matmul %27, %38, %cst_30 {dimension_numbers = #tpu.dot_dimension_numbers<[1], [0], [0], [1], [0, 0, 1, 1], [], []>} : vector<1x16xf32>, vector<16x32xf32>, vector<1x32xf32> -> vector<1x32xf32>
      %40 = vector.extract_strided_slice %29 {offsets = [1, 0], sizes = [1, 32], strides = [1, 1]} : vector<3x32xf32> to vector<1x32xf32>
      %41 = arith.addf %39, %40 : vector<1x32xf32>
      %cst_31 = arith.constant 0.000000e+00 : f32
      %42 = vector.broadcast %cst_31 : f32 to vector<1x32xf32>
      %43 = arith.maximumf %41, %42 : vector<1x32xf32>
      %c2 = arith.constant 2 : index
      %c0_32 = arith.constant 0 : index
      %c0_33 = arith.constant 0 : index
      %44 = vector.load %arg4[%c2, %c0_32, %c0_33] : memref<3x16x32xf32, #tpu.memory_space<vmem>>, vector<1x16x32xf32>
      %45 = vector.shape_cast %44 : vector<1x16x32xf32> to vector<16x32xf32>
      %cst_34 = arith.constant dense<0.000000e+00> : vector<1x32xf32>
      %46 = tpu.matmul %28, %45, %cst_34 {dimension_numbers = #tpu.dot_dimension_numbers<[1], [0], [0], [1], [0, 0, 1, 1], [], []>} : vector<1x16xf32>, vector<16x32xf32>, vector<1x32xf32> -> vector<1x32xf32>
      %47 = vector.extract_strided_slice %29 {offsets = [2, 0], sizes = [1, 32], strides = [1, 1]} : vector<3x32xf32> to vector<1x32xf32>
      %48 = arith.addf %46, %47 : vector<1x32xf32>
      %cst_35 = arith.constant 0.000000e+00 : f32
      %49 = vector.broadcast %cst_35 : f32 to vector<1x32xf32>
      %50 = arith.maximumf %48, %49 : vector<1x32xf32>
      %51 = tpu.concatenate %36, %43, %50 in 1 : vector<1x32xf32>, vector<1x32xf32>, vector<1x32xf32> -> vector<1x96xf32>
      %c0_36 = arith.constant 0 : index
      %c0_37 = arith.constant 0 : index
      %52 = vector.load %arg6[%c0_36, %c0_37] : memref<96x16xf32, #tpu.memory_space<vmem>>, vector<96x16xf32>
      %cst_38 = arith.constant dense<0.000000e+00> : vector<1x16xf32>
      %53 = tpu.matmul %51, %52, %cst_38 {dimension_numbers = #tpu.dot_dimension_numbers<[1], [0], [0], [1], [0, 0, 1, 1], [], []>} : vector<1x96xf32>, vector<96x16xf32>, vector<1x16xf32> -> vector<1x16xf32>
      %c0_39 = arith.constant 0 : index
      %c0_40 = arith.constant 0 : index
      %54 = vector.load %arg7[%c0_39, %c0_40] : memref<1x16xf32, #tpu.memory_space<vmem>>, vector<1x16xf32>
      %55 = arith.addf %53, %54 : vector<1x16xf32>
      %cst_41 = arith.constant dense<0.000000e+00> : vector<1xf32>
      %56 = vector.multi_reduction <add>, %55, %cst_41 [1] : vector<1x16xf32> to vector<1xf32>
      %57 = vector.shape_cast %56 : vector<1xf32> to vector<1x1xf32>
      %cst_42 = arith.constant 1.600000e+01 : f32
      %58 = vector.broadcast %cst_42 : f32 to vector<1x1xf32>
      %59 = arith.divf %57, %58 : vector<1x1xf32>
      %60 = vector.broadcast %59 : vector<1x1xf32> to vector<1x16xf32>
      %61 = arith.subf %55, %60 : vector<1x16xf32>
      %62 = arith.mulf %61, %61 : vector<1x16xf32>
      %cst_43 = arith.constant dense<0.000000e+00> : vector<1xf32>
      %63 = vector.multi_reduction <add>, %62, %cst_43 [1] : vector<1x16xf32> to vector<1xf32>
      %64 = vector.shape_cast %63 : vector<1xf32> to vector<1x1xf32>
      %cst_44 = arith.constant 1.600000e+01 : f32
      %65 = vector.broadcast %cst_44 : f32 to vector<1x1xf32>
      %66 = arith.divf %64, %65 : vector<1x1xf32>
      %67 = vector.broadcast %59 : vector<1x1xf32> to vector<1x16xf32>
      %68 = arith.subf %55, %67 : vector<1x16xf32>
      %cst_45 = arith.constant 9.99999974E-6 : f32
      %69 = vector.broadcast %cst_45 : f32 to vector<1x1xf32>
      %70 = arith.addf %66, %69 : vector<1x1xf32>
      %71 = math.rsqrt %70 : vector<1x1xf32>
      %72 = vector.broadcast %71 : vector<1x1xf32> to vector<1x16xf32>
      %73 = arith.mulf %68, %72 : vector<1x16xf32>
      %cst_46 = arith.constant 0.000000e+00 : f32
      %74 = vector.broadcast %cst_46 : f32 to vector<1x16xf32>
      %75 = arith.maximumf %73, %74 : vector<1x16xf32>
      %76 = arith.addf %28, %75 : vector<1x16xf32>
      %c0_47 = arith.constant 0 : index
      %c0_48 = arith.constant 0 : index
      %77 = vector.load %arg8[%c0_47, %c0_48] : memref<1x16xf32, #tpu.memory_space<vmem>>, vector<1x16xf32>
      tpu.vector_store %arg8[%c0_47, %c0_48], %76 {strides = array<i32>} : memref<1x16xf32, #tpu.memory_space<vmem>>, vector<1x16xf32>,
    } else {
    }
    return
  }
  func.func @transform_0(%arg0: i32) -> (i32, i32) {
    %c0_i32 = arith.constant 0 : i32
    %c0_i32_0 = arith.constant 0 : i32
    return %arg0, %c0_i32 : i32, i32
  }
  func.func @transform_1(%arg0: i32) -> (i32, i32) {
    %c0_i32 = arith.constant 0 : i32
    %c0_i32_0 = arith.constant 0 : i32
    %c0_i32_1 = arith.constant 0 : i32
    return %c0_i32, %c0_i32_0 : i32, i32
  }
  func.func @transform_2(%arg0: i32) -> (i32, i32) {
    %c0_i32 = arith.constant 0 : i32
    %c0_i32_0 = arith.constant 0 : i32
    %c0_i32_1 = arith.constant 0 : i32
    return %c0_i32, %c0_i32_0 : i32, i32
  }
  func.func @transform_3(%arg0: i32) -> (i32, i32, i32) {
    %c0_i32 = arith.constant 0 : i32
    %c0_i32_0 = arith.constant 0 : i32
    %c0_i32_1 = arith.constant 0 : i32
    %c0_i32_2 = arith.constant 0 : i32
    return %c0_i32, %c0_i32_0, %c0_i32_1 : i32, i32, i32
  }
  func.func @transform_4(%arg0: i32) -> (i32, i32) {
    %c0_i32 = arith.constant 0 : i32
    %c0_i32_0 = arith.constant 0 : i32
    %c0_i32_1 = arith.constant 0 : i32
    return %c0_i32, %c0_i32_0 : i32, i32
  }
  func.func @transform_5(%arg0: i32) -> (i32, i32) {
    %c0_i32 = arith.constant 0 : i32
    %c0_i32_0 = arith.constant 0 : i32
    %c0_i32_1 = arith.constant 0 : i32
    return %c0_i32, %c0_i32_0 : i32, i32
  }
  func.func @transform_6(%arg0: i32) -> (i32, i32) {
    %c0_i32 = arith.constant 0 : i32
    %c0_i32_0 = arith.constant 0 : i32
    %c0_i32_1 = arith.constant 0 : i32
    return %c0_i32, %c0_i32_0 : i32, i32
  }
  func.func @transform_7(%arg0: i32) -> (i32, i32) {
    %c0_i32 = arith.constant 0 : i32
    %c0_i32_0 = arith.constant 0 : i32
    %c0_i32_1 = arith.constant 0 : i32
    return %c0_i32, %c0_i32_0 : i32, i32
  }
}

</mosaic_0001>

<llo_original>
// kernel: tpu_custom_call.1
$region0: #{tpu_custom_call.1}
  #allocation0 [shape = 'u32[]', space=smem, size = 0x4, offset = 0x4, fixed_abs, tag = 'smem constant byte address 0x4 - core index']
  #allocation1 [shape = 'u32[72,128]{1,0:T(1,128)}', space=vmem, size = 0x9000, scoped, tag = 'internal scratch']
  #allocation2 [shape = 'f32[8,128]{1,0:T(8,128)}', space=vmem, size = 0x1000, scoped, tag = 'scratch operand']
  #allocation3 [shape = 'f32[8,128]{1,0:T(8,128)}', space=vmem, size = 0x1000, scoped, tag = 'scratch operand']
  %s0 = inlined_call_operand.vmem [shape: f32[64,128], index: 0, kind: input, shape index: {}]
  %s1 = inlined_call_operand.vmem [shape: f32[128,16], index: 1, kind: input, shape index: {}]
  %s2 = inlined_call_operand.vmem [shape: f32[1,16], index: 2, kind: input, shape index: {}]
  %s3 = inlined_call_operand.vmem [shape: f32[3,16,32], index: 3, kind: input, shape index: {}]
  %s4 = inlined_call_operand.vmem [shape: f32[3,32], index: 4, kind: input, shape index: {}]
  %s5 = inlined_call_operand.vmem [shape: f32[96,16], index: 5, kind: input, shape index: {}]
  %s6 = inlined_call_operand.vmem [shape: f32[1,16], index: 6, kind: input, shape index: {}]
  %s7 = inlined_call_operand.hbm [shape: f32[1,16], index: 7, kind: output, shape index: {}]
  %s8 = sld [smem:[#allocation0]]
  $region77: #{tpu_custom_call.1} parent=0
    _
  %s10 = ssub.s32 1, %s8
  %s11 = scalar_select 0, %s10, %s8
  $region1: #{tpu_custom_call.1} parent=0
    #allocation4 [shape = 'u8[512]{0}', space=vmem, size = 0x400, scoped, tag = 'output window, operand 0, single buffered']
    #allocation5 [shape = 's32[2]{0}', space=sflag, size = 0x8, scoped, tag = 'scoped memory for tpu_custom_call.1']
    %12 = vsyncpa [#allocation5], 0
    loop: start=0, step=1, limit=4
    $region2: #{tpu_custom_call.1} parent=1 // loop_pre_header
      _
    $region3: #{tpu_custom_call.1} parent=1 // loop_header
      %s14 = sphi 0, %s18
      %p15 = scmp.ge.s32.totalorder %s14, 4
      %s24 = sphi 0, %s26
      %s27 = sphi 0, %s24
      %s28 = sphi 0, %s27
      %s44 = sphi 0, %s28
      %s48 = sphi 0, %s48
      %s50 = sphi 0, %s48
      %s51 = sphi 0, %s50
      %s65 = sphi 0, %s51
      %s69 = sphi 0, %s69
      %s71 = sphi 0, %s69
      %s72 = sphi 0, %s71
      %s86 = sphi 0, %s72
      %s90 = sphi 0, %s90
      %s92 = sphi 0, %s90
      %s93 = sphi 0, %s92
      %s107 = sphi 0, %s93
      %s111 = sphi 0, %s111
      %s113 = sphi 0, %s111
      %s114 = sphi 0, %s113
      %s128 = sphi 0, %s114
      %s132 = sphi 0, %s132
      %s134 = sphi 0, %s132
      %s135 = sphi 0, %s134
      %s149 = sphi 0, %s135
      %s153 = sphi 0, %s153
      %s155 = sphi 0, %s153
      %s156 = sphi 0, %s155
      %s170 = sphi 0, %s156
      %s174 = sphi 0, %s174
      %s176 = sphi 0, %s174
      %s177 = sphi 0, %s176
      %s191 = sphi 0, %s177
    $region4: #{tpu_custom_call.1} parent=1 // loop_header_branch
      %17 = sbr.rel (%p15) target = $region8
    $region5: #{tpu_custom_call.1} parent=1 // loop_body
      %s19 = ssub.s32 %s14, 1
      %s20 = ssub.s32 %s14, 2
      %s21 = sadd.s32 %s14, 1
      %s22 = ssub.s32 %s14, %s21
      %p23 = scmp.eq.s32.totalorder %s22, 0
      %s25 = sadd.s32 %s24, 1
      %s26 = scalar_select %p23, %s24, %s25
      %p29 = pneg %p23
      %p30 = scmp.eq.s32.totalorder %s14, 1
      %p31 = por %p29, %p30
      %p32 = scmp.ne.s32.totalorder %s24, %s27
      %p33 = scmp.eq.s32.totalorder %s14, 0
      %p34 = por %p32, %p33
      %p35 = scmp.ne.s32.totalorder %s24, %s27
      %p36 = scmp.eq.s32.totalorder %s19, 1
      %p37 = por %p35, %p36
      %p38 = scmp.ne.s32.totalorder %s27, %s28
      %p39 = scmp.eq.s32.totalorder %s19, 0
      %p40 = por %p38, %p39
      %p41 = scmp.ne.s32.totalorder %s27, %s28
      %p42 = scmp.eq.s32.totalorder %s20, 1
      %p43 = por %p41, %p42
      %p45 = scmp.ne.s32.totalorder %s28, %s44
      %p46 = scmp.eq.s32.totalorder %s20, 0
      %p47 = por %p45, %p46
      %s49 = sadd.s32 %s48, 1
      %p52 = scmp.eq.s32.totalorder %s14, 1
      %p53 = scmp.ne.s32.totalorder %s48, %s50
      %p54 = scmp.eq.s32.totalorder %s14, 0
      %p55 = por %p53, %p54
      %p56 = scmp.ne.s32.totalorder %s48, %s50
      %p57 = scmp.eq.s32.totalorder %s19, 1
      %p58 = por %p56, %p57
      %p59 = scmp.ne.s32.totalorder %s50, %s51
      %p60 = scmp.eq.s32.totalorder %s19, 0
      %p61 = por %p59, %p60
      %p62 = scmp.ne.s32.totalorder %s50, %s51
      %p63 = scmp.eq.s32.totalorder %s20, 1
      %p64 = por %p62, %p63
      %p66 = scmp.ne.s32.totalorder %s51, %s65
      %p67 = scmp.eq.s32.totalorder %s20, 0
      %p68 = por %p66, %p67
      %s70 = sadd.s32 %s69, 1
      %p73 = scmp.eq.s32.totalorder %s14, 1
      %p74 = scmp.ne.s32.totalorder %s69, %s71
      %p75 = scmp.eq.s32.totalorder %s14, 0
      %p76 = por %p74, %p75
      %p77 = scmp.ne.s32.totalorder %s69, %s71
      %p78 = scmp.eq.s32.totalorder %s19, 1
      %p79 = por %p77, %p78
      %p80 = scmp.ne.s32.totalorder %s71, %s72
      %p81 = scmp.eq.s32.totalorder %s19, 0
      %p82 = por %p80, %p81
      %p83 = scmp.ne.s32.totalorder %s71, %s72
      %p84 = scmp.eq.s32.totalorder %s20, 1
      %p85 = por %p83, %p84
      %p87 = scmp.ne.s32.totalorder %s72, %s86
      %p88 = scmp.eq.s32.totalorder %s20, 0
      %p89 = por %p87, %p88
      %s91 = sadd.s32 %s90, 1
      %p94 = scmp.eq.s32.totalorder %s14, 1
      %p95 = scmp.ne.s32.totalorder %s90, %s92
      %p96 = scmp.eq.s32.totalorder %s14, 0
      %p97 = por %p95, %p96
      %p98 = scmp.ne.s32.totalorder %s90, %s92
      %p99 = scmp.eq.s32.totalorder %s19, 1
      %p100 = por %p98, %p99
      %p101 = scmp.ne.s32.totalorder %s92, %s93
      %p102 = scmp.eq.s32.totalorder %s19, 0
      %p103 = por %p101, %p102
      %p104 = scmp.ne.s32.totalorder %s92, %s93
      %p105 = scmp.eq.s32.totalorder %s20, 1
      %p106 = por %p104, %p105
      %p108 = scmp.ne.s32.totalorder %s93, %s107
      %p109 = scmp.eq.s32.totalorder %s20, 0
      %p110 = por %p108, %p109
      %s112 = sadd.s32 %s111, 1
      %p115 = scmp.eq.s32.totalorder %s14, 1
      %p116 = scmp.ne.s32.totalorder %s111, %s113
      %p117 = scmp.eq.s32.totalorder %s14, 0
      %p118 = por %p116, %p117
      %p119 = scmp.ne.s32.totalorder %s111, %s113
      %p120 = scmp.eq.s32.totalorder %s19, 1
      %p121 = por %p119, %p120
      %p122 = scmp.ne.s32.totalorder %s113, %s114
      %p123 = scmp.eq.s32.totalorder %s19, 0
      %p124 = por %p122, %p123
      %p125 = scmp.ne.s32.totalorder %s113, %s114
      %p126 = scmp.eq.s32.totalorder %s20, 1
      %p127 = por %p125, %p126
      %p129 = scmp.ne.s32.totalorder %s114, %s128
      %p130 = scmp.eq.s32.totalorder %s20, 0
      %p131 = por %p129, %p130
      %s133 = sadd.s32 %s132, 1
      %p136 = scmp.eq.s32.totalorder %s14, 1
      %p137 = scmp.ne.s32.totalorder %s132, %s134
      %p138 = scmp.eq.s32.totalorder %s14, 0
      %p139 = por %p137, %p138
      %p140 = scmp.ne.s32.totalorder %s132, %s134
      %p141 = scmp.eq.s32.totalorder %s19, 1
      %p142 = por %p140, %p141
      %p143 = scmp.ne.s32.totalorder %s134, %s135
      %p144 = scmp.eq.s32.totalorder %s19, 0
      %p145 = por %p143, %p144
      %p146 = scmp.ne.s32.totalorder %s134, %s135
      %p147 = scmp.eq.s32.totalorder %s20, 1
      %p148 = por %p146, %p147
      %p150 = scmp.ne.s32.totalorder %s135, %s149
      %p151 = scmp.eq.s32.totalorder %s20, 0
      %p152 = por %p150, %p151
      %s154 = sadd.s32 %s153, 1
      %p157 = scmp.eq.s32.totalorder %s14, 1
      %p158 = scmp.ne.s32.totalorder %s153, %s155
      %p159 = scmp.eq.s32.totalorder %s14, 0
      %p160 = por %p158, %p159
      %p161 = scmp.ne.s32.totalorder %s153, %s155
      %p162 = scmp.eq.s32.totalorder %s19, 1
      %p163 = por %p161, %p162
      %p164 = scmp.ne.s32.totalorder %s155, %s156
      %p165 = scmp.eq.s32.totalorder %s19, 0
      %p166 = por %p164, %p165
      %p167 = scmp.ne.s32.totalorder %s155, %s156
      %p168 = scmp.eq.s32.totalorder %s20, 1
      %p169 = por %p167, %p168
      %p171 = scmp.ne.s32.totalorder %s156, %s170
      %p172 = scmp.eq.s32.totalorder %s20, 0
      %p173 = por %p171, %p172
      %s175 = sadd.s32 %s174, 1
      %p178 = scmp.eq.s32.totalorder %s14, 1
      %p179 = scmp.ne.s32.totalorder %s174, %s176
      %p180 = scmp.eq.s32.totalorder %s14, 0
      %p181 = por %p179, %p180
      %p182 = scmp.ne.s32.totalorder %s174, %s176
      %p183 = scmp.eq.s32.totalorder %s19, 1
      %p184 = por %p182, %p183
      %p185 = scmp.ne.s32.totalorder %s176, %s177
      %p186 = scmp.eq.s32.totalorder %s19, 0
      %p187 = por %p185, %p186
      %p188 = scmp.ne.s32.totalorder %s176, %s177
      %p189 = scmp.eq.s32.totalorder %s20, 1
      %p190 = por %p188, %p189
      %p192 = scmp.ne.s32.totalorder %s177, %s191
      %p193 = scmp.eq.s32.totalorder %s20, 0
      %p194 = por %p192, %p193
      %p195 = scmp.le.s32.totalorder 1, %s14
      %p196 = scmp.lt.s32.totalorder %s14, 3
      %p197 = pnand %p195, %p196
      %p198 = pneg %p197
      // Predicated region
      $region9: #{tpu_custom_call.1} parent=5 // pred_check
        _
      $region10: #{tpu_custom_call.1} parent=5 // pred_check_branch
        %200 = sbr.rel (%p197) target = $region12
      $region11: #{tpu_custom_call.1} parent=5 // pred_region
        %s201 = ssub.s32 %s14, 1
        // Predicated region
        $region13: #{tpu_custom_call.1} parent=11 // pred_check
          %p202 = pneg %p61
        $region14: #{tpu_custom_call.1} parent=11 // pred_check_branch
          %204 = sbr.rel (%p202) target = $region16
        $region15: #{tpu_custom_call.1} parent=11 // pred_region
          _
        $region16: #{tpu_custom_call.1} parent=11 // pred_fallthru
          _
        // Predicated region
        $region17: #{tpu_custom_call.1} parent=11 // pred_check
          %p205 = pneg %p82
        $region18: #{tpu_custom_call.1} parent=11 // pred_check_branch
          %207 = sbr.rel (%p205) target = $region20
        $region19: #{tpu_custom_call.1} parent=11 // pred_region
          _
        $region20: #{tpu_custom_call.1} parent=11 // pred_fallthru
          _
        // Predicated region
        $region21: #{tpu_custom_call.1} parent=11 // pred_check
          %p208 = pneg %p103
        $region22: #{tpu_custom_call.1} parent=11 // pred_check_branch
          %210 = sbr.rel (%p208) target = $region24
        $region23: #{tpu_custom_call.1} parent=11 // pred_region
          _
        $region24: #{tpu_custom_call.1} parent=11 // pred_fallthru
          _
        // Predicated region
        $region25: #{tpu_custom_call.1} parent=11 // pred_check
          %p211 = pneg %p124
        $region26: #{tpu_custom_call.1} parent=11 // pred_check_branch
          %213 = sbr.rel (%p211) target = $region28
        $region27: #{tpu_custom_call.1} parent=11 // pred_region
          _
        $region28: #{tpu_custom_call.1} parent=11 // pred_fallthru
          _
        // Predicated region
        $region29: #{tpu_custom_call.1} parent=11 // pred_check
          %p214 = pneg %p145
        $region30: #{tpu_custom_call.1} parent=11 // pred_check_branch
          %216 = sbr.rel (%p214) target = $region32
        $region31: #{tpu_custom_call.1} parent=11 // pred_region
          _
        $region32: #{tpu_custom_call.1} parent=11 // pred_fallthru
          _
        // Predicated region
        $region33: #{tpu_custom_call.1} parent=11 // pred_check
          %p217 = pneg %p166
        $region34: #{tpu_custom_call.1} parent=11 // pred_check_branch
          %219 = sbr.rel (%p217) target = $region36
        $region35: #{tpu_custom_call.1} parent=11 // pred_region
          _
        $region36: #{tpu_custom_call.1} parent=11 // pred_fallthru
          _
      $region12: #{tpu_custom_call.1} parent=5 // pred_fallthru
        _
      %p220 = scmp.lt.s32.totalorder %s14, 2
      // Predicated region
      $region37: #{tpu_custom_call.1} parent=5 // pred_check
        %p221 = pneg %p220
      $region38: #{tpu_custom_call.1} parent=5 // pred_check_branch
        %223 = sbr.rel (%p221) target = $region40
      $region39: #{tpu_custom_call.1} parent=5 // pred_region
        // Predicated region
        $region41: #{tpu_custom_call.1} parent=39 // pred_check
          %p224 = pneg %p34
        $region42: #{tpu_custom_call.1} parent=39 // pred_check_branch
          %226 = sbr.rel (%p224) target = $region44
        $region43: #{tpu_custom_call.1} parent=39 // pred_region
          %s227 = smul.u32 4, %s14
          %p228 = scmp.lt.s32.totalorder %s227, 7
          %s229 = scalar_select %p228, %s227, 7
          %s230 = smul.addr %s229, 8
          %s231 = scalar_lea.vmem %s0, %s230
          %s232 = smul.u32 4, %s14
        $region44: #{tpu_custom_call.1} parent=39 // pred_fallthru
          _
      $region40: #{tpu_custom_call.1} parent=5 // pred_fallthru
        _
      %p233 = scmp.le.s32.totalorder 1, %s14
      %p234 = scmp.lt.s32.totalorder %s14, 3
      %p235 = pnand %p233, %p234
      %p236 = pneg %p235
      // Predicated region
      $region45: #{tpu_custom_call.1} parent=5 // pred_check
        _
      $region46: #{tpu_custom_call.1} parent=5 // pred_check_branch
        %238 = sbr.rel (%p235) target = $region48
      $region47: #{tpu_custom_call.1} parent=5 // pred_region
        %s239 = ssub.s32 %s14, 1
        %s240 = smul.u32 4, %s19
        %p241 = scmp.lt.s32.totalorder %s240, 7
        %s242 = scalar_select %p241, %s240, 7
        %s243 = smul.addr %s242, 8
        %s244 = scalar_lea.vmem %s0, %s243
        %p245 = pneg %p40
        %p246 = pneg %p37
        %p247 = pneg %p61
        %p248 = pneg %p58
        %p249 = pneg %p82
        %p250 = pneg %p79
        %p251 = pneg %p103
        %p252 = pneg %p100
        %p253 = pneg %p124
        %p254 = pneg %p121
        %p255 = pneg %p145
        %p256 = pneg %p142
        %p257 = pneg %p166
        %p258 = pneg %p163
        %p259 = pneg %p187
        %p260 = pneg %p184
        %s261 = smul.u32 4, %s19
        %p262 = scmp.lt.s32.totalorder %s261, 7
        %s263 = scalar_select %p262, %s261, 7
        %s264 = smul.addr %s263, 8
        %s265 = scalar_lea.vmem %s0, %s264
        %s266 = smul.u32 4, %s19
        %p267 = scmp.eq.s32.totalorder %s19, 0
        // Predicated region
        $region49: #{tpu_custom_call.1} parent=47 // pred_check
          %p268 = pneg %p267
        $region50: #{tpu_custom_call.1} parent=47 // pred_check_branch
          %270 = sbr.rel (%p268) target = $region52
        $region51: #{tpu_custom_call.1} parent=47 // pred_region
          %271 = vst [vmem:[#allocation2] sm:$0xff] 0.0
          %272 = vst [vmem:[#allocation3] sm:$0xff] 0.0
        $region52: #{tpu_custom_call.1} parent=47 // pred_fallthru
          _
        %v273 = vld [vmem:[%s265] sm:$0xff]
        %v274 = vld [vmem:[%s265 + $0x8] sm:$0xff]
        %v275 = vld [vmem:[%s265 + $0x10] sm:$0xff]
        %v276 = vld [vmem:[%s265 + $0x18] sm:$0xff]
        %v277 = vadd.f32 %v273, %v274
        %v278 = vadd.f32 %v277, %v275
        %v279 = vadd.f32 %v278, %v276
        %p280 = scmp.lt.s32.totalorder %s19, 1
        // Predicated region
        $region53: #{tpu_custom_call.1} parent=47 // pred_check
          %p281 = pneg %p280
        $region54: #{tpu_custom_call.1} parent=47 // pred_check_branch
          %283 = sbr.rel (%p281) target = $region56
        $region55: #{tpu_custom_call.1} parent=47 // pred_region
          %v284 = vld [vmem:[#allocation2] sm:$0xff]
          %v285 = vadd.f32 %v284, %v279
          %286 = vst [vmem:[#allocation2] sm:$0xff] %v285
        $region56: #{tpu_custom_call.1} parent=47 // pred_fallthru
          _
        %p287 = scmp.ge.s32.totalorder %s19, 1
        // Predicated region
        $region57: #{tpu_custom_call.1} parent=47 // pred_check
          %p288 = pneg %p287
        $region58: #{tpu_custom_call.1} parent=47 // pred_check_branch
          %290 = sbr.rel (%p288) target = $region60
        $region59: #{tpu_custom_call.1} parent=47 // pred_region
          %v291 = vld [vmem:[#allocation3] sm:$0xff]
          %v292 = vadd.f32 %v291, %v279
          %293 = vst [vmem:[#allocation3] sm:$0xff] %v292
        $region60: #{tpu_custom_call.1} parent=47 // pred_fallthru
          _
        %p294 = scmp.eq.s32.totalorder %s19, 1
        // Predicated region
        $region61: #{tpu_custom_call.1} parent=47 // pred_check
          %p295 = pneg %p294
        $region62: #{tpu_custom_call.1} parent=47 // pred_check_branch
          %297 = sbr.rel (%p295) target = $region64
        $region63: #{tpu_custom_call.1} parent=47 // pred_region
          %v298 = vld [vmem:[%s1] sm:$0xff]
          %v299 = vld [vmem:[%s1 + $0x8] sm:$0xff]
          %v300 = vld [vmem:[%s1 + $0x10] sm:$0xff]
          %v301 = vld [vmem:[%s1 + $0x18] sm:$0xff]
          %v302 = vld [vmem:[%s1 + $0x20] sm:$0xff]
          %v303 = vld [vmem:[%s1 + $0x28] sm:$0xff]
          %v304 = vld [vmem:[%s1 + $0x30] sm:$0xff]
          %v305 = vld [vmem:[%s1 + $0x38] sm:$0xff]
          %v306 = vld [vmem:[%s1 + $0x40] sm:$0xff]
          %v307 = vld [vmem:[%s1 + $0x48] sm:$0xff]
          %v308 = vld [vmem:[%s1 + $0x50] sm:$0xff]
          %v309 = vld [vmem:[%s1 + $0x58] sm:$0xff]
          %v310 = vld [vmem:[%s1 + $0x60] sm:$0xff]
          %v311 = vld [vmem:[%s1 + $0x68] sm:$0xff]
          %v312 = vld [vmem:[%s1 + $0x70] sm:$0xff]
          %v313 = vld [vmem:[%s1 + $0x78] sm:$0xff]
          %v314 = vld [vmem:[#allocation2] sm:$0xff]
          %v315 = vrot.slane %v314, 4
          %v316 = vadd.f32 %v314, %v315
          %v317 = vrot.slane %v316, 2
          %v318 = vadd.f32 %v316, %v317
          %v319 = vrot.slane %v318, 1
          %v320 = vadd.f32 %v318, %v319
          %v321 = vld [vmem:[#allocation3] sm:$0xff]
          %v322 = vrot.slane %v321, 4
          %v323 = vadd.f32 %v321, %v322
          %v324 = vrot.slane %v323, 2
          %v325 = vadd.f32 %v323, %v324
          %v326 = vrot.slane %v325, 1
          %v327 = vadd.f32 %v325, %v326
          %328 = vmatpush.msra.mxu0 %v313
          %329 = vmatpush.msra.mxu0 %v312
          %330 = vmatpush.msra.mxu0 %v311
          %331 = vmatpush.msra.mxu0 %v310
          %332 = vmatpush.msra.mxu0 %v309
          %333 = vmatpush.msra.mxu0 %v308
          %334 = vmatpush.msra.mxu0 %v307
          %335 = vmatpush.msra.mxu0 %v306
          %336 = vmatpush.msra.mxu0 %v305
          %337 = vmatpush.msra.mxu0 %v304
          %338 = vmatpush.msra.mxu0 %v303
          %339 = vmatpush.msra.mxu0 %v302
          %340 = vmatpush.msra.mxu0 %v301
          %341 = vmatpush.msra.mxu0 %v300
          %342 = vmatpush.msra.mxu0 %v299
          %343 = vmatpush.msra.mxu0 %v298
          %344 = vmatmul.f32.gmra.mxu0 %v320
          %v345 = vpop.f32.mrf.mxu0
          %v346 = vadd.f32 0.0, %v345
          %347 = vdwg.mxu0
          %v348 = vmul.f32 %v346, 0.083333336
          %349 = vmatpush.msra.mxu0 %v313
          %350 = vmatpush.msra.mxu0 %v312
          %351 = vmatpush.msra.mxu0 %v311
          %352 = vmatpush.msra.mxu0 %v310
          %353 = vmatpush.msra.mxu0 %v309
          %354 = vmatpush.msra.mxu0 %v308
          %355 = vmatpush.msra.mxu0 %v307
          %356 = vmatpush.msra.mxu0 %v306
          %357 = vmatpush.msra.mxu0 %v305
          %358 = vmatpush.msra.mxu0 %v304
          %359 = vmatpush.msra.mxu0 %v303
          %360 = vmatpush.msra.mxu0 %v302
          %361 = vmatpush.msra.mxu0 %v301
          %362 = vmatpush.msra.mxu0 %v300
          %363 = vmatpush.msra.mxu0 %v299
          %364 = vmatpush.msra.mxu0 %v298
          %365 = vmatmul.f32.gmra.mxu0 %v327
          %v366 = vpop.f32.mrf.mxu0
          %v367 = vadd.f32 0.0, %v366
          %368 = vdwg.mxu0
          %v369 = vmul.f32 %v367, 0.025
          %v370 = vld [vmem:[%s2] sm:$0x1]
          %v371 = vld [vmem:[%s4] sm:$0x7]
          %v372 = vld [vmem:[%s3] sm:$0xff]
          %v373 = vld [vmem:[%s3 + $0x8] sm:$0xff]
          %vm374 = vcmask 130048
          %v376 = vsel %vm374, %v348, 0
          %378 = vmatpush.msra.mxu0 0.0
          %379 = vmatpush.msra.mxu0 0.0
          %380 = vmatpush.msra.mxu0 0.0
          %381 = vmatpush.msra.mxu0 0.0
          %382 = vmatpush.msra.mxu0 0.0
          %383 = vmatpush.msra.mxu0 0.0
          %384 = vmatpush.msra.mxu0 0.0
          %385 = vmatpush.msra.mxu0 0.0
          %386 = vmatpush.msra.mxu0 0.0
          %387 = vmatpush.msra.mxu0 0.0
          %388 = vmatpush.msra.mxu0 0.0
          %389 = vmatpush.msra.mxu0 0.0
          %390 = vmatpush.msra.mxu0 0.0
          %391 = vmatpush.msra.mxu0 0.0
          %392 = vmatpush.msra.mxu0 %v373
          %393 = vmatpush.msra.mxu0 %v372
          %394 = vmatmul.f32.gmra.mxu0 %v376
          %v395 = vpop.f32.mrf.mxu0
          %v396 = vadd.f32 %v371, %v395
          %397 = vdwg.mxu0
          %v398 = vmax.f32 %v396, 0.0
          %s399 = scalar_lea.vmem %s3, 16
          %v400 = vld [vmem:[%s399] sm:$0xff]
          %v401 = vld [vmem:[%s399 + $0x8] sm:$0xff]
          %v403 = vrot.slane %v371, 1
          %v406 = vsel %vm374, %v369, 0
          %408 = vmatpush.msra.mxu0 0.0
          %409 = vmatpush.msra.mxu0 0.0
          %410 = vmatpush.msra.mxu0 0.0
          %411 = vmatpush.msra.mxu0 0.0
          %412 = vmatpush.msra.mxu0 0.0
          %413 = vmatpush.msra.mxu0 0.0
          %414 = vmatpush.msra.mxu0 0.0
          %415 = vmatpush.msra.mxu0 0.0
          %416 = vmatpush.msra.mxu0 0.0
          %417 = vmatpush.msra.mxu0 0.0
          %418 = vmatpush.msra.mxu0 0.0
          %419 = vmatpush.msra.mxu0 0.0
          %420 = vmatpush.msra.mxu0 0.0
          %421 = vmatpush.msra.mxu0 0.0
          %422 = vmatpush.msra.mxu0 %v401
          %423 = vmatpush.msra.mxu0 %v400
          %424 = vmatmul.f32.gmra.mxu0 %v406
          %v425 = vpop.f32.mrf.mxu0
          %v426 = vadd.f32 %v403, %v425
          %427 = vdwg.mxu0
          %v428 = vmax.f32 %v426, 0.0
          %s429 = scalar_lea.vmem %s3, 32
          %v430 = vld [vmem:[%s429] sm:$0xff]
          %v431 = vld [vmem:[%s429 + $0x8] sm:$0xff]
          %v432 = vrot.slane %v371, 2
          %v435 = vsel %vm374, %v370, 0
          %437 = vmatpush.msra.mxu0 0.0
          %438 = vmatpush.msra.mxu0 0.0
          %439 = vmatpush.msra.mxu0 0.0
          %440 = vmatpush.msra.mxu0 0.0
          %441 = vmatpush.msra.mxu0 0.0
          %442 = vmatpush.msra.mxu0 0.0
          %443 = vmatpush.msra.mxu0 0.0
          %444 = vmatpush.msra.mxu0 0.0
          %445 = vmatpush.msra.mxu0 0.0
          %446 = vmatpush.msra.mxu0 0.0
          %447 = vmatpush.msra.mxu0 0.0
          %448 = vmatpush.msra.mxu0 0.0
          %449 = vmatpush.msra.mxu0 0.0
          %450 = vmatpush.msra.mxu0 0.0
          %451 = vmatpush.msra.mxu0 %v431
          %452 = vmatpush.msra.mxu0 %v430
          %453 = vmatmul.f32.gmra.mxu0 %v435
          %v454 = vpop.f32.mrf.mxu0
          %v455 = vadd.f32 %v432, %v454
          %456 = vdwg.mxu0
          %v457 = vmax.f32 %v455, 0.0
          %459 = vrot.lane.b32.xlu0 %v428, 32
          %v460 = vpop.permute.xlu0 %459
          %463 = vrot.lane.b32.xlu0 %v457, 64
          %v464 = vpop.permute.xlu0 %463
          %vm466 = vcmask 261120
          %v467 = vsel %vm466, %v398, %v460
          %vm468 = vcmask 523264
          %v469 = vsel %vm468, %v467, %v464
          %v470 = vld [vmem:[%s5] sm:$0xff]
          %v471 = vld [vmem:[%s5 + $0x8] sm:$0xff]
          %v472 = vld [vmem:[%s5 + $0x10] sm:$0xff]
          %v473 = vld [vmem:[%s5 + $0x18] sm:$0xff]
          %v474 = vld [vmem:[%s5 + $0x20] sm:$0xff]
          %v475 = vld [vmem:[%s5 + $0x28] sm:$0xff]
          %v476 = vld [vmem:[%s5 + $0x30] sm:$0xff]
          %v477 = vld [vmem:[%s5 + $0x38] sm:$0xff]
          %v478 = vld [vmem:[%s5 + $0x40] sm:$0xff]
          %v479 = vld [vmem:[%s5 + $0x48] sm:$0xff]
          %v480 = vld [vmem:[%s5 + $0x50] sm:$0xff]
          %v481 = vld [vmem:[%s5 + $0x58] sm:$0xff]
          %v482 = vld [vmem:[%s6] sm:$0x1]
          %vm483 = vcmask 785408
          %v485 = vsel %vm483, %v469, 0
          %487 = vmatpush.msra.mxu0 0.0
          %488 = vmatpush.msra.mxu0 0.0
          %489 = vmatpush.msra.mxu0 0.0
          %490 = vmatpush.msra.mxu0 0.0
          %491 = vmatpush.msra.mxu0 %v481
          %492 = vmatpush.msra.mxu0 %v480
          %493 = vmatpush.msra.mxu0 %v479
          %494 = vmatpush.msra.mxu0 %v478
          %495 = vmatpush.msra.mxu0 %v477
          %496 = vmatpush.msra.mxu0 %v476
          %497 = vmatpush.msra.mxu0 %v475
          %498 = vmatpush.msra.mxu0 %v474
          %499 = vmatpush.msra.mxu0 %v473
          %500 = vmatpush.msra.mxu0 %v472
          %501 = vmatpush.msra.mxu0 %v471
          %502 = vmatpush.msra.mxu0 %v470
          %503 = vmatmul.f32.gmra.mxu0 %v485
          %v504 = vpop.f32.mrf.mxu0
          %v505 = vadd.f32 %v482, %v504
          %506 = vdwg.mxu0
          %vm507 = vcmask 122880
          %v508 = vsel %vm507, %v505, 0.0
          %509 = vadd.xlane.f32.xlu0 %v508
          %v510 = vpop.xlane.xlu0 %509
          %v511 = vrcp.pop 16.0
          %v512 = vmul.f32 16.0, %v511
          %v513 = vsub.f32 1.0, %v512
          %v514 = vmul.f32 %v511, %v513
          %v515 = vadd.f32 %v511, %v514
          %vm516 = vweird.f32 %v511
          %v517 = vsel %vm516, %v511, %v515
          %v518 = vmul.f32 %v510, %v517
          %v519 = vsub.f32 %v505, %v518
          %v520 = vmul.f32 %v519, %v519
          %v521 = vsel %vm507, %v520, 0.0
          %522 = vadd.xlane.f32.xlu0 %v521
          %v523 = vpop.xlane.xlu0 %522
          %v524 = vmul.f32 %v523, %v517
          %v525 = vadd.f32 %v524, 1e-05
          %v526 = vrsqrt.pop %v525
          %v527 = vmul.f32 %v526, %v525
          %v528 = vmul.f32 %v527, %v526
          %v529 = vmul.f32 0.5, %v528
          %v530 = vsub.f32 1.5, %v529
          %v531 = vmul.f32 %v526, %v530
          %vm532 = vweird.f32 %v525
          %vm533 = vweird.f32 %v526
          %vm534 = vmor %vm532, %vm533
          %v535 = vsel %vm534, %v526, %v531
          %v536 = vmul.f32 %v519, %v535
          %v537 = vmax.f32 %v536, 0.0
          %v538 = vadd.f32 %v370, %v537
          %539 = vst.msk [vmem:[#allocation4] sm:$0x1] %vm507, %v538
        $region64: #{tpu_custom_call.1} parent=47 // pred_fallthru
          _
        // Predicated region
        $region65: #{tpu_custom_call.1} parent=47 // pred_check
          %p540 = pneg %p184
        $region66: #{tpu_custom_call.1} parent=47 // pred_check_branch
          %542 = sbr.rel (%p540) target = $region68
        $region67: #{tpu_custom_call.1} parent=47 // pred_region
          %544 = vsyncadd [#allocation5], 0
          %s546 = sshll.u32 [#allocation4], 4
          %s547 = int_to_ptr.vmem [resolvable:$true] %s546
          %s548 = sshll.u32 %s7, 4
          %s549 = int_to_ptr.hbm [resolvable:$true] %s548
          %551 = dma.vmem_to_hbm [thread:$0]  %s547, 16, %s549, [#allocation5]
        $region68: #{tpu_custom_call.1} parent=47 // pred_fallthru
          _
        // Predicated region
        $region69: #{tpu_custom_call.1} parent=47 // pred_check
          %p552 = pneg %p184
        $region70: #{tpu_custom_call.1} parent=47 // pred_check_branch
          %554 = sbr.rel (%p552) target = $region72
        $region71: #{tpu_custom_call.1} parent=47 // pred_region
          %556 = dma.done [#allocation5], 16
        $region72: #{tpu_custom_call.1} parent=47 // pred_fallthru
          _
      $region48: #{tpu_custom_call.1} parent=5 // pred_fallthru
        _
      %p557 = scmp.le.s32.totalorder 2, %s14
      // Predicated region
      $region73: #{tpu_custom_call.1} parent=5 // pred_check
        %p558 = pneg %p557
      $region74: #{tpu_custom_call.1} parent=5 // pred_check_branch
        %560 = sbr.rel (%p558) target = $region76
      $region75: #{tpu_custom_call.1} parent=5 // pred_region
        %s561 = ssub.s32 %s14, 2
      $region76: #{tpu_custom_call.1} parent=5 // pred_fallthru
        _
    $region6: #{tpu_custom_call.1} parent=1 // loop_footer
      %s18 = sadd.s32 1, %s14
    $region7: #{tpu_custom_call.1} parent=1 // loop_footer_branch
      %13 = sbr.rel target = $region3
    $region8: #{tpu_custom_call.1} parent=1 // loop_exit
      _
    %562 = vsyncpa [#allocation5], 1
    %s563 = scalar_lea.sflag [#allocation5], 1
    %564 = vsyncpa %s563, 1

</llo_original>
